<compile_context>
chip_gen: v7x
topology: tpu7x:2x2x1
jax: 0.10.0
libtpu: 0.0.40
codegen_flags: <defaults>
</compile_context>

<pallas_src>
import functools

import jax
import jax.numpy as jnp
from jax.experimental import pallas as pl
from jax.experimental.pallas import tpu as pltpu

_CHUNK = 256   # samples per in-kernel sub-step (2 lane-tiles wide)
_HID = 64      # Linear1 output width (fixed by the module)


def _round_up(x, m):
    return (x + m - 1) // m * m


def _round_down(x, m):
    return x // m * m


def _choose_tiling(batch, z_dim, chunk):
    """Pick (TB, num_tiles, B_pad).

    Big DMA tiles (few grid steps), >= 2 tiles when the batch allows (v7x
    megacore), VMEM footprint bounded (v7x has only 64 MiB physical VMEM).
    """
    zd_pad = _round_up(z_dim, 128)              # VMEM pads the lane dim to 128
    row_bytes = zd_pad * 4                      # f32 z rows as stored in VMEM
    # ~4 MiB per z input buffer (double-buffered by the pipeline), <= 8192 rows.
    tb_cap = max(chunk, min(8192, _round_down((4 << 20) // row_bytes, chunk)))

    b_ceil = _round_up(batch, chunk)
    # Multi-tile TB must be a multiple of 8*chunk so the (TB//chunk, chunk)
    # y/logits blocks keep (8, 128)-aligned block shapes.
    multi_unit = 8 * chunk
    if b_ceil > multi_unit:
        tb = max(multi_unit, _round_down(tb_cap, multi_unit))
        # Guarantee >= 2 grid tiles so ("parallel",) can use both v7x TensorCores.
        tb = min(tb, _round_up(-(-batch // 2), multi_unit))
    else:
        tb = b_ceil                              # small batch: one resident tile
    b_pad = _round_up(batch, tb)
    return tb, b_pad // tb, b_pad


def _classifier_kernel(z_ref, y_ref, w1_ref, b1_ref, w2_ref, b2_ref,
                       logits_ref, bce_ref, *, batch, chunk):
    # z_ref:      (TB, z_dim) f32            — natural layout, batch on sublanes
    # y_ref:      (TB//chunk, chunk) f32     — batch folded lane-dense
    # w1_ref:     (64, z_dim) bf16 ; b1_ref/w2_ref: (64, 1) f32 ; b2_ref: (1,) f32 SMEM
    # logits_ref: (TB//chunk, chunk) f32     — lane-dense logits
    # bce_ref:    (1, 128) f32               — per-tile partial BCE sum in lane 0
    tile_rows = z_ref.shape[0]
    n_chunks = tile_rows // chunk
    tile_start = pl.program_id(0) * tile_rows

    w1 = w1_ref[...]            # resident tiny weights, hoisted out of the loop
    b1 = b1_ref[...]
    w2 = w2_ref[...]
    b2 = b2_ref[0]

    # Hoisted (JAX does not CSE broadcast/iota inside loops).
    lane = jax.lax.broadcasted_iota(jnp.int32, (1, chunk), 1)

    def chunk_body(c, bce_acc):
        row0 = pl.multiple_of(c * chunk, chunk)
        # bf16 MXU inputs, f32 accumulation.  Contracting z_dim on both operands
        # puts the batch on the lane axis of h (lane-dense downstream).
        zc = z_ref[pl.ds(row0, chunk), :].astype(jnp.bfloat16)          # (chunk, zd)
        h = jnp.einsum('hz,cz->hc', w1, zc,
                       preferred_element_type=jnp.float32)              # (64, chunk)
        h = jnp.maximum(h + b1, 0.0)                                     # Linear1 + ReLU

        # Linear2 (64 -> 1): VPU multiply + sublane (XLU) reduce; stays lane-dense.
        x = jnp.sum(h * w2, axis=0, keepdims=True) + b2                  # (1, chunk)
        logits_ref[pl.ds(c, 1), :] = x                                   # full-row lane-dense store

        # BCEWithLogitsLoss (reduction='none'), numerically stable form, reduced to
        # a per-tile partial sum.  Masking of batch-padding lanes is unconditional:
        # ~3 VPU ops on 2 vregs per chunk, cheaper than a per-chunk branch.
        y = y_ref[pl.ds(c, 1), :]                                        # (1, chunk)
        bce = jnp.maximum(x, 0.0) - x * y + jnp.log1p(jnp.exp(-jnp.abs(x)))
        valid = (tile_start + row0 + lane) < batch
        return bce_acc + jnp.sum(jnp.where(valid, bce, 0.0))

    bce_sum = jax.lax.fori_loop(0, n_chunks, chunk_body, jnp.float32(0.0),
                                unroll=True)

    lane128 = jax.lax.broadcasted_iota(jnp.int32, (1, 128), 1)
    bce_ref[...] = jnp.where(lane128 == 0, bce_sum, 0.0)


@jax.jit
def classifier_forward(z, y, w1, b1, w2, b2):
    """Fused classifier head.  Returns (scalar mean BCE loss, logits of shape (B,)).

    z : (B, z_dim)   latents (output of vae.enc.encode_nkl), natural layout
    y : (B,)         binary targets in {0, 1}
    w1: (64, z_dim)  Linear1 weight (PyTorch layout),  b1: (64,)
    w2: (1, 64)      Linear2 weight (PyTorch layout),  b2: (1,)
    """
    B, zd = z.shape
    hid = w1.shape[0]
    chunk = _CHUNK

    TB, num_tiles, B_pad = _choose_tiling(B, zd, chunk)
    rows = B_pad // chunk

    # z stays in natural (B, z_dim) f32 layout — no wrapper transpose/cast pass.
    # Only pad when the batch is not already a multiple of the tile.
    z_p = z.astype(jnp.float32)
    if B_pad != B:
        z_p = jnp.pad(z_p, ((0, B_pad - B), (0, 0)))
    # y folded lane-dense: (rows, chunk) — metadata reshape + tiny pad.
    y_p = jnp.pad(y.astype(jnp.float32).reshape(-1), (0, B_pad - B)).reshape(rows, chunk)

    w1b = w1.astype(jnp.bfloat16)                    # (hid, zd), resident in VMEM
    b1c = b1.reshape(hid, 1).astype(jnp.float32)     # broadcast over lanes
    w2c = w2.reshape(hid, 1).astype(jnp.float32)     # column for the sublane reduce
    b2c = b2.reshape(1).astype(jnp.float32)          # SMEM scalar

    # VMEM budget (z double-buffer dominates; lane dim padded to 128 inside VMEM).
    zd_pad = _round_up(zd, 128)
    vmem_bytes = (2 * TB * zd_pad * 4                      # z tile double buffer
                  + 2 * 2 * TB * 4                         # y + logits tiles, double-buffered
                  + 2 * (hid * zd_pad * 2 + 2 * hid * 128 * 4)   # resident weights (generous)
                  + 2 * 128 * 4)                           # bce partials
    vmem_limit = min(48 << 20, max(24 << 20, vmem_bytes * 5 // 4 + (4 << 20)))

    kernel = functools.partial(_classifier_kernel, batch=B, chunk=chunk)

    logits2d, bce_part = pl.pallas_call(
        kernel,
        out_shape=(
            jax.ShapeDtypeStruct((rows, chunk), jnp.float32),         # logits (folded)
            jax.ShapeDtypeStruct((1, 128 * num_tiles), jnp.float32),  # per-tile BCE sums
        ),
        grid=(num_tiles,),
        in_specs=[
            pl.BlockSpec((TB, zd), lambda i: (i, 0)),               # z batch tile (natural)
            pl.BlockSpec((TB // chunk, chunk), lambda i: (i, 0)),   # y batch tile (folded)
            pl.BlockSpec((hid, zd), lambda i: (0, 0)),              # W1 (resident)
            pl.BlockSpec((hid, 1), lambda i: (0, 0)),               # b1
            pl.BlockSpec((hid, 1), lambda i: (0, 0)),               # w2 column
            pl.BlockSpec(memory_space=pltpu.MemorySpace.SMEM),      # b2 scalar
        ],
        out_specs=(
            pl.BlockSpec((TB // chunk, chunk), lambda i: (i, 0)),
            pl.BlockSpec((1, 128), lambda i: (0, i)),
        ),
        compiler_params=pltpu.CompilerParams(
            dimension_semantics=("parallel",),
            vmem_limit_bytes=vmem_limit),
    )(z_p, y_p, w1b, b1c, w2c, b2c)

    loss = jnp.sum(bce_part) / jnp.float32(B)        # reduction='none' -> .mean()
    logits = logits2d.reshape(-1)[:B]                # .squeeze(dim=-1)
    return loss, logits


def init_params(key, z_dim, hidden=_HID):
    """Deterministic init matching the PyTorch module (cls == 2 branch).

    Linear1: (64, z_dim) weight, kaiming_normal_(fan_in, relu) -> std = sqrt(2/z_dim)
    Linear2: (1, 64)     weight, kaiming_normal_(fan_in, relu) -> std = sqrt(2/64)
    Biases keep PyTorch default Linear init: U(-1/sqrt(fan_in), 1/sqrt(fan_in)).
    Weights are kept in PyTorch (out, in) layout; the wrapper handles layout.
    """
    k1, k2, k3, k4 = jax.random.split(key, 4)
    std1 = (2.0 / z_dim) ** 0.5
    std2 = (2.0 / hidden) ** 0.5
    w1 = jax.random.normal(k1, (hidden, z_dim), jnp.float32) * std1
    w2 = jax.random.normal(k2, (1, hidden), jnp.float32) * std2
    b1 = jax.random.uniform(k3, (hidden,), jnp.float32,
                            -1.0 / z_dim ** 0.5, 1.0 / z_dim ** 0.5)
    b2 = jax.random.uniform(k4, (1,), jnp.float32,
                            -1.0 / hidden ** 0.5, 1.0 / hidden ** 0.5)
    return w1, b1, w2, b2


if __name__ == "__main__":
    B = 8
    Z_DIM = 32
    LABEL = 1

    key = jax.random.PRNGKey(0)
    kz, ky, kp = jax.random.split(key, 3)

    # Stand-in latent z (output of the external vae.enc.encode_nkl) and targets y.
    z = jax.random.normal(kz, (B, Z_DIM), jnp.float32)
    y = jax.random.bernoulli(ky, 0.5, (B,)).astype(jnp.float32)

    w1, b1, w2, b2 = init_params(kp, Z_DIM)

    loss, logits = classifier_forward(z, y, w1, b1, w2, b2)
    loss = jax.block_until_ready(loss)
    logits = jax.block_until_ready(logits)

    # f32 reference with explicit tolerance (validates the bf16-MXU path).
    h_fp = jnp.maximum(z @ w1.T + b1, 0.0)
    logits_fp = (h_fp @ w2.T + b2)[:, 0]
    bce_fp = (jnp.maximum(logits_fp, 0.0) - logits_fp * y
              + jnp.log1p(jnp.exp(-jnp.abs(logits_fp))))
    loss_fp = bce_fp.mean()
    assert jnp.allclose(logits, logits_fp, atol=5e-2, rtol=5e-2), (logits, logits_fp)
    assert jnp.allclose(loss, loss_fp, atol=2e-2, rtol=2e-2), (loss, loss_fp)

    # Host-side accuracy printout, mirroring the PyTorch forward's print().
    pred_prob = jax.nn.sigmoid(logits)
    pred = [LABEL if float(pred_prob[i]) >= 0.5 else 0 for i in range(B)]
    acc = sum(1 if pred[i] == float(y[i]) else 0 for i in range(B)) / B
    print("total:", B, "acc for batch:", acc)
    print("loss:", float(loss))

    print("KERNEL_OK")
</pallas_src>

<mosaic_0001>
module attributes {stable_mosaic.version = 11 : i64} {
  func.func @_classifier_kernel(%arg0: i32, %arg1: memref<256x32xf32, #tpu.memory_space<vmem>>, %arg2: memref<1x256xf32, #tpu.memory_space<vmem>>, %arg3: memref<64x32xbf16, #tpu.memory_space<vmem>>, %arg4: memref<64x1xf32, #tpu.memory_space<vmem>>, %arg5: memref<64x1xf32, #tpu.memory_space<vmem>>, %arg6: memref<1xf32, #tpu.memory_space<smem>>, %arg7: memref<1x256xf32, #tpu.memory_space<vmem>>, %arg8: memref<1x128xf32, #tpu.memory_space<vmem>>) attributes {dimension_semantics = [#tpu.dimension_semantics<parallel>], iteration_bounds = array<i64: 1>, scalar_prefetch = 0 : i64, scratch_operands = 0 : i64, tpu.core_type = #tpu.core_type<tc>, window_params = [{transform_indices = @transform_0, window_bounds = array<i64: 256, 32>}, {transform_indices = @transform_1, window_bounds = array<i64: 1, 256>}, {pipeline_mode = #tpu.pipeline_mode<synchronous>, transform_indices = @transform_2, window_bounds = array<i64: 64, 32>}, {pipeline_mode = #tpu.pipeline_mode<synchronous>, transform_indices = @transform_3, window_bounds = array<i64: 64, 1>}, {pipeline_mode = #tpu.pipeline_mode<synchronous>, transform_indices = @transform_4, window_bounds = array<i64: 64, 1>}, {transform_indices = @transform_5, window_bounds = array<i64: 1>}, {transform_indices = @transform_6, window_bounds = array<i64: 1, 256>}, {transform_indices = @transform_7, window_bounds = array<i64: 1, 128>}]} {
    %c256_i32 = arith.constant 256 : i32
    %0 = arith.muli %arg0, %c256_i32 : i32
    %c0 = arith.constant 0 : index
    %c0_0 = arith.constant 0 : index
    %1 = vector.load %arg3[%c0, %c0_0] : memref<64x32xbf16, #tpu.memory_space<vmem>>, vector<64x32xbf16>
    %c0_1 = arith.constant 0 : index
    %c0_2 = arith.constant 0 : index
    %2 = vector.load %arg4[%c0_1, %c0_2] : memref<64x1xf32, #tpu.memory_space<vmem>>, vector<64x1xf32>
    %c0_3 = arith.constant 0 : index
    %c0_4 = arith.constant 0 : index
    %3 = vector.load %arg5[%c0_3, %c0_4] : memref<64x1xf32, #tpu.memory_space<vmem>>, vector<64x1xf32>
    %c0_5 = arith.constant 0 : index
    %4 = memref.load %arg6[%c0_5] : memref<1xf32, #tpu.memory_space<smem>>
    %5 = tpu.iota {dimensions = array<i32: 1>} : vector<1x256xi32>
    %cst = arith.constant 0.000000e+00 : f32
    %c0_i32 = arith.constant 0 : i32
    %c256_i32_6 = arith.constant 256 : i32
    %6 = arith.muli %c0_i32, %c256_i32_6 : i32
    %7 = tpu.assume_multiple %6, 256 : i32
    %8 = arith.index_cast %7 : i32 to index
    %c0_7 = arith.constant 0 : index
    %9 = vector.load %arg1[%8, %c0_7] : memref<256x32xf32, #tpu.memory_space<vmem>>, vector<256x32xf32>
    %10 = arith.truncf %9 : vector<256x32xf32> to vector<256x32xbf16>
    "tpu.trace_start"() <{level = 10 : i32, message = "hz,cz->hc"}> : () -> ()
    %cst_8 = arith.constant dense<0.000000e+00> : vector<64x256xf32>
    %11 = tpu.matmul %1, %10, %cst_8 {dimension_numbers = #tpu.dot_dimension_numbers<[1], [1], [0], [0], [0, 0, 1, 0], [], []>} : vector<64x32xbf16>, vector<256x32xbf16>, vector<64x256xf32> -> vector<64x256xf32>
    "tpu.trace_stop"() : () -> ()
    %12 = vector.broadcast %2 : vector<64x1xf32> to vector<64x256xf32>
    %13 = arith.addf %11, %12 : vector<64x256xf32>
    %cst_9 = arith.constant 0.000000e+00 : f32
    %14 = vector.broadcast %cst_9 : f32 to vector<64x256xf32>
    %15 = arith.maximumf %13, %14 : vector<64x256xf32>
    %16 = vector.broadcast %3 : vector<64x1xf32> to vector<64x256xf32>
    %17 = arith.mulf %15, %16 : vector<64x256xf32>
    %cst_10 = arith.constant dense<0.000000e+00> : vector<256xf32>
    %18 = vector.multi_reduction <add>, %17, %cst_10 [0] : vector<64x256xf32> to vector<256xf32>
    %19 = vector.shape_cast %18 : vector<256xf32> to vector<1x256xf32>
    %20 = vector.broadcast %4 : f32 to vector<1x256xf32>
    %21 = arith.addf %19, %20 : vector<1x256xf32>
    %22 = arith.index_cast %c0_i32 : i32 to index
    %c0_11 = arith.constant 0 : index
    %23 = vector.load %arg7[%22, %c0_11] : memref<1x256xf32, #tpu.memory_space<vmem>>, vector<1x256xf32>
    tpu.vector_store %arg7[%22, %c0_11], %21 {strides = array<i32>} : memref<1x256xf32, #tpu.memory_space<vmem>>, vector<1x256xf32>,
    %24 = arith.index_cast %c0_i32 : i32 to index
    %c0_12 = arith.constant 0 : index
    %25 = vector.load %arg2[%24, %c0_12] : memref<1x256xf32, #tpu.memory_space<vmem>>, vector<1x256xf32>
    %cst_13 = arith.constant 0.000000e+00 : f32
    %26 = vector.broadcast %cst_13 : f32 to vector<1x256xf32>
    %27 = arith.maximumf %21, %26 : vector<1x256xf32>
    %28 = arith.mulf %21, %25 : vector<1x256xf32>
    %29 = arith.subf %27, %28 : vector<1x256xf32>
    %30 = math.absf %21 : vector<1x256xf32>
    %cst_14 = arith.constant 0.000000e+00 : f32
    %31 = vector.broadcast %cst_14 : f32 to vector<1x256xf32>
    %32 = arith.subf %31, %30 : vector<1x256xf32>
    %33 = math.exp %32 : vector<1x256xf32>
    %34 = math.log1p %33 : vector<1x256xf32>
    %35 = arith.addf %29, %34 : vector<1x256xf32>
    %36 = arith.addi %0, %7 : i32
    %37 = vector.broadcast %36 : i32 to vector<1x256xi32>
    %38 = arith.addi %37, %5 : vector<1x256xi32>
    %c8_i32 = arith.constant 8 : i32
    %39 = vector.broadcast %c8_i32 : i32 to vector<1x256xi32>
    %40 = arith.cmpi slt, %38, %39 : vector<1x256xi32>
    %cst_15 = arith.constant 0.000000e+00 : f32
    %41 = vector.broadcast %cst_15 : f32 to vector<1x256xf32>
    %42 = arith.select %40, %35, %41 : vector<1x256xi1>, vector<1x256xf32>
    %43 = vector.shape_cast %42 : vector<1x256xf32> to vector<1x1x256xf32>
    %cst_16 = arith.constant dense<0.000000e+00> : vector<1xf32>
    %44 = vector.multi_reduction <add>, %43, %cst_16 [1, 2] : vector<1x1x256xf32> to vector<1xf32>
    %45 = vector.shape_cast %44 : vector<1xf32> to vector<1x1x1xf32>
    %46 = vector.extract %45[0, 0, 0] : f32 from vector<1x1x1xf32>
    %47 = arith.addf %cst, %46 : f32
    %c1_i32 = arith.constant 1 : i32
    %48 = tpu.iota {dimensions = array<i32: 1>} : vector<1x128xi32>
    %c0_i32_17 = arith.constant 0 : i32
    %49 = vector.broadcast %c0_i32_17 : i32 to vector<1x128xi32>
    %50 = arith.cmpi eq, %48, %49 : vector<1x128xi32>
    %cst_18 = arith.constant 0.000000e+00 : f32
    %51 = vector.broadcast %47 : f32 to vector<1x128xf32>
    %52 = vector.broadcast %cst_18 : f32 to vector<1x128xf32>
    %53 = arith.select %50, %51, %52 : vector<1x128xi1>, vector<1x128xf32>
    %c0_19 = arith.constant 0 : index
    %c0_20 = arith.constant 0 : index
    %54 = vector.load %arg8[%c0_19, %c0_20] : memref<1x128xf32, #tpu.memory_space<vmem>>, vector<1x128xf32>
    tpu.vector_store %arg8[%c0_19, %c0_20], %53 {strides = array<i32>} : memref<1x128xf32, #tpu.memory_space<vmem>>, vector<1x128xf32>,
    return
  }
  func.func @transform_0(%arg0: i32) -> (i32, i32) {
    %c0_i32 = arith.constant 0 : i32
    %c0_i32_0 = arith.constant 0 : i32
    return %arg0, %c0_i32 : i32, i32
  }
  func.func @transform_1(%arg0: i32) -> (i32, i32) {
    %c0_i32 = arith.constant 0 : i32
    %c0_i32_0 = arith.constant 0 : i32
    return %arg0, %c0_i32 : i32, i32
  }
  func.func @transform_2(%arg0: i32) -> (i32, i32) {
    %c0_i32 = arith.constant 0 : i32
    %c0_i32_0 = arith.constant 0 : i32
    %c0_i32_1 = arith.constant 0 : i32
    return %c0_i32, %c0_i32_0 : i32, i32
  }
  func.func @transform_3(%arg0: i32) -> (i32, i32) {
    %c0_i32 = arith.constant 0 : i32
    %c0_i32_0 = arith.constant 0 : i32
    %c0_i32_1 = arith.constant 0 : i32
    return %c0_i32, %c0_i32_0 : i32, i32
  }
  func.func @transform_4(%arg0: i32) -> (i32, i32) {
    %c0_i32 = arith.constant 0 : i32
    %c0_i32_0 = arith.constant 0 : i32
    %c0_i32_1 = arith.constant 0 : i32
    return %c0_i32, %c0_i32_0 : i32, i32
  }
  func.func @transform_5(%arg0: i32) -> i32 {
    %c0_i32 = arith.constant 0 : i32
    %c0_i32_0 = arith.constant 0 : i32
    return %c0_i32 : i32
  }
  func.func @transform_6(%arg0: i32) -> (i32, i32) {
    %c0_i32 = arith.constant 0 : i32
    %c0_i32_0 = arith.constant 0 : i32
    return %arg0, %c0_i32 : i32, i32
  }
  func.func @transform_7(%arg0: i32) -> (i32, i32) {
    %c0_i32 = arith.constant 0 : i32
    %c0_i32_0 = arith.constant 0 : i32
    return %c0_i32, %arg0 : i32, i32
  }
}

</mosaic_0001>

<llo_original>
// kernel: classifier_forward.1
$region0: #{classifier_forward.1}
  #allocation0 [shape = 'u32[]', space=smem, size = 0x4, offset = 0x4, fixed_abs, tag = 'smem constant byte address 0x4 - core index']
  #allocation1 [shape = 'u32[144,128]{1,0:T(1,128)}', space=vmem, size = 0x12000, scoped, tag = 'internal scratch']
  #allocation2 [shape = 'f32[1]{0:T(128)S(6)}', space=smem, size = 0x200, scoped, tag = 'scoped memory for classifier_forward.1']
  %s0 = inlined_call_operand.vmem [shape: f32[256,32], index: 0, kind: input, shape index: {}]
  %s1 = inlined_call_operand.vmem [shape: f32[1,256], index: 1, kind: input, shape index: {}]
  %s2 = inlined_call_operand.vmem [shape: bf16[64,32], index: 2, kind: input, shape index: {}]
  %s3 = inlined_call_operand.vmem [shape: f32[64,1], index: 3, kind: input, shape index: {}]
  %s4 = inlined_call_operand.vmem [shape: f32[64,1], index: 4, kind: input, shape index: {}]
  %s5 = inlined_call_operand.<no memory space> [shape: f32[1], index: 5, kind: input, shape index: {}]
  %s6 = inlined_call_operand.vmem [shape: f32[1,256], index: 6, kind: output, shape index: {0}]
  %s7 = inlined_call_operand.vmem [shape: f32[1,128], index: 7, kind: output, shape index: {1}]
  %8 = xla_tuple %s6, %s7
  %s9 = sld [smem:[#allocation0]]
  $region42: #{classifier_forward.1} parent=0
    _
  %s11 = ssub.s32 1, %s9
  %s12 = scalar_select 0, %s11, %s9
  %13 = sst [smem:[#allocation2]] %s5
  // Predicated region
  $region2: #{classifier_forward.1} parent=0 // pred_check
    _
  $region3: #{classifier_forward.1} parent=0 // pred_check_branch
    %15 = sbr.rel (0) target = $region5
  $region4: #{classifier_forward.1} parent=0 // pred_region
    _
  $region5: #{classifier_forward.1} parent=0 // pred_fallthru
    _
  // Predicated region
  $region6: #{classifier_forward.1} parent=0 // pred_check
    _
  $region7: #{classifier_forward.1} parent=0 // pred_check_branch
    %17 = sbr.rel (0) target = $region9
  $region8: #{classifier_forward.1} parent=0 // pred_region
    _
  $region9: #{classifier_forward.1} parent=0 // pred_fallthru
    _
  // Predicated region
  $region10: #{classifier_forward.1} parent=0 // pred_check
    _
  $region11: #{classifier_forward.1} parent=0 // pred_check_branch
    %19 = sbr.rel (0) target = $region13
  $region12: #{classifier_forward.1} parent=0 // pred_region
    _
  $region13: #{classifier_forward.1} parent=0 // pred_fallthru
    _
  // Predicated region
  $region14: #{classifier_forward.1} parent=0 // pred_check
    _
  $region15: #{classifier_forward.1} parent=0 // pred_check_branch
    %21 = sbr.rel (0) target = $region17
  $region16: #{classifier_forward.1} parent=0 // pred_region
    _
  $region17: #{classifier_forward.1} parent=0 // pred_fallthru
    _
  // Predicated region
  $region18: #{classifier_forward.1} parent=0 // pred_check
    _
  $region19: #{classifier_forward.1} parent=0 // pred_check_branch
    %23 = sbr.rel (0) target = $region21
  $region20: #{classifier_forward.1} parent=0 // pred_region
    _
  $region21: #{classifier_forward.1} parent=0 // pred_fallthru
    _
  // Predicated region
  $region22: #{classifier_forward.1} parent=0 // pred_check
    _
  $region23: #{classifier_forward.1} parent=0 // pred_check_branch
    %25 = sbr.rel (0) target = $region25
  $region24: #{classifier_forward.1} parent=0 // pred_region
    _
  $region25: #{classifier_forward.1} parent=0 // pred_fallthru
    _
  %s27 = smul.u32 0, 256
  %v28 = vld [vmem:[%s2] sm:$0xf]
  %v29 = vld [vmem:[%s2 + $0x4] sm:$0xf]
  %v30 = vld [vmem:[%s2 + $0x8] sm:$0xf]
  %v31 = vld [vmem:[%s2 + $0xc] sm:$0xf]
  %v32 = vld [vmem:[%s2 + $0x10] sm:$0xf]
  %v33 = vld [vmem:[%s2 + $0x14] sm:$0xf]
  %v34 = vld [vmem:[%s2 + $0x18] sm:$0xf]
  %v35 = vld [vmem:[%s2 + $0x1c] sm:$0xf]
  %v36 = vld [vmem:[%s3] sm:$0xff]
  %v37 = vld [vmem:[%s3 + $0x8] sm:$0xff]
  %v38 = vld [vmem:[%s3 + $0x10] sm:$0xff]
  %v39 = vld [vmem:[%s3 + $0x18] sm:$0xff]
  %v40 = vld [vmem:[%s3 + $0x20] sm:$0xff]
  %v41 = vld [vmem:[%s3 + $0x28] sm:$0xff]
  %v42 = vld [vmem:[%s3 + $0x30] sm:$0xff]
  %v43 = vld [vmem:[%s3 + $0x38] sm:$0xff]
  %v44 = vld [vmem:[%s4] sm:$0xff]
  %v45 = vld [vmem:[%s4 + $0x8] sm:$0xff]
  %v46 = vld [vmem:[%s4 + $0x10] sm:$0xff]
  %v47 = vld [vmem:[%s4 + $0x18] sm:$0xff]
  %v48 = vld [vmem:[%s4 + $0x20] sm:$0xff]
  %v49 = vld [vmem:[%s4 + $0x28] sm:$0xff]
  %v50 = vld [vmem:[%s4 + $0x30] sm:$0xff]
  %v51 = vld [vmem:[%s4 + $0x38] sm:$0xff]
  %s52 = sld [smem:[#allocation2]]
  %v53 = vlaneseq
  %v54 = vand.u32 %v53, 127
  %v55 = vadd.s32 %v54, 128
  %v56 = vld [vmem:[%s0] sm:$0xff]
  %v57 = vld [vmem:[%s0 + $0x8] sm:$0xff]
  %v58 = vld [vmem:[%s0 + $0x10] sm:$0xff]
  %v59 = vld [vmem:[%s0 + $0x18] sm:$0xff]
  %v60 = vld [vmem:[%s0 + $0x20] sm:$0xff]
  %v61 = vld [vmem:[%s0 + $0x28] sm:$0xff]
  %v62 = vld [vmem:[%s0 + $0x30] sm:$0xff]
  %v63 = vld [vmem:[%s0 + $0x38] sm:$0xff]
  %v64 = vld [vmem:[%s0 + $0x40] sm:$0xff]
  %v65 = vld [vmem:[%s0 + $0x48] sm:$0xff]
  %v66 = vld [vmem:[%s0 + $0x50] sm:$0xff]
  %v67 = vld [vmem:[%s0 + $0x58] sm:$0xff]
  %v68 = vld [vmem:[%s0 + $0x60] sm:$0xff]
  %v69 = vld [vmem:[%s0 + $0x68] sm:$0xff]
  %v70 = vld [vmem:[%s0 + $0x70] sm:$0xff]
  %v71 = vld [vmem:[%s0 + $0x78] sm:$0xff]
  %v72 = vld [vmem:[%s0 + $0x80] sm:$0xff]
  %v73 = vld [vmem:[%s0 + $0x88] sm:$0xff]
  %v74 = vld [vmem:[%s0 + $0x90] sm:$0xff]
  %v75 = vld [vmem:[%s0 + $0x98] sm:$0xff]
  %v76 = vld [vmem:[%s0 + $0xa0] sm:$0xff]
  %v77 = vld [vmem:[%s0 + $0xa8] sm:$0xff]
  %v78 = vld [vmem:[%s0 + $0xb0] sm:$0xff]
  %v79 = vld [vmem:[%s0 + $0xb8] sm:$0xff]
  %v80 = vld [vmem:[%s0 + $0xc0] sm:$0xff]
  %v81 = vld [vmem:[%s0 + $0xc8] sm:$0xff]
  %v82 = vld [vmem:[%s0 + $0xd0] sm:$0xff]
  %v83 = vld [vmem:[%s0 + $0xd8] sm:$0xff]
  %v84 = vld [vmem:[%s0 + $0xe0] sm:$0xff]
  %v85 = vld [vmem:[%s0 + $0xe8] sm:$0xff]
  %v86 = vld [vmem:[%s0 + $0xf0] sm:$0xff]
  %v87 = vld [vmem:[%s0 + $0xf8] sm:$0xff]
  %v88 = vpack.c.bf16 %v57, %v56
  %v89 = vpack.c.bf16 %v59, %v58
  %v90 = vpack.c.bf16 %v61, %v60
  %v91 = vpack.c.bf16 %v63, %v62
  %v92 = vpack.c.bf16 %v65, %v64
  %v93 = vpack.c.bf16 %v67, %v66
  %v94 = vpack.c.bf16 %v69, %v68
  %v95 = vpack.c.bf16 %v71, %v70
  %v96 = vpack.c.bf16 %v73, %v72
  %v97 = vpack.c.bf16 %v75, %v74
  %v98 = vpack.c.bf16 %v77, %v76
  %v99 = vpack.c.bf16 %v79, %v78
  %v100 = vpack.c.bf16 %v81, %v80
  %v101 = vpack.c.bf16 %v83, %v82
  %v102 = vpack.c.bf16 %v85, %v84
  %v103 = vpack.c.bf16 %v87, %v86
  %105 = vset.pattern.permute.xlu0 0
  %106 = vperm.xlu0 %105, %v36
  %v107 = vpop.permute.xlu0 %106
  %110 = vset.pattern.permute.xlu0 0
  %111 = vperm.xlu0 %110, %v37
  %v112 = vpop.permute.xlu0 %111
  %115 = vset.pattern.permute.xlu0 0
  %116 = vperm.xlu0 %115, %v38
  %v117 = vpop.permute.xlu0 %116
  %120 = vset.pattern.permute.xlu0 0
  %121 = vperm.xlu0 %120, %v39
  %v122 = vpop.permute.xlu0 %121
  %125 = vset.pattern.permute.xlu0 0
  %126 = vperm.xlu0 %125, %v40
  %v127 = vpop.permute.xlu0 %126
  %130 = vset.pattern.permute.xlu0 0
  %131 = vperm.xlu0 %130, %v41
  %v132 = vpop.permute.xlu0 %131
  %135 = vset.pattern.permute.xlu0 0
  %136 = vperm.xlu0 %135, %v42
  %v137 = vpop.permute.xlu0 %136
  %140 = vset.pattern.permute.xlu0 0
  %141 = vperm.xlu0 %140, %v43
  %v142 = vpop.permute.xlu0 %141
  %v152 = vunpack.c.l.b16 %v28
  %v153 = vunpack.c.l.b16 %v29
  %v154 = vunpack.c.l.b16 %v30
  %v155 = vunpack.c.l.b16 %v31
  %v156 = vunpack.c.l.b16 %v32
  %v157 = vunpack.c.l.b16 %v33
  %v158 = vunpack.c.l.b16 %v34
  %v159 = vunpack.c.l.b16 %v35
  %v160 = vpack.c.b16 %v153, %v152
  %v161 = vpack.c.b16 %v155, %v154
  %v162 = vpack.c.b16 %v157, %v156
  %v163 = vpack.c.b16 %v159, %v158
  %vm164 = vcmask 261120
  %v166 = vsel %vm164, %v160, 0
  %v169 = vsel %vm164, %v161, 0
  %v172 = vsel %vm164, %v162, 0
  %v175 = vsel %vm164, %v163, 0
  %v178 = vsel %vm164, %v88, 0
  %v181 = vsel %vm164, %v89, 0
  %v184 = vsel %vm164, %v90, 0
  %v187 = vsel %vm164, %v91, 0
  %v190 = vsel %vm164, %v92, 0
  %v193 = vsel %vm164, %v93, 0
  %v196 = vsel %vm164, %v94, 0
  %v199 = vsel %vm164, %v95, 0
  %v202 = vsel %vm164, %v96, 0
  %v205 = vsel %vm164, %v97, 0
  %v208 = vsel %vm164, %v98, 0
  %v211 = vsel %vm164, %v99, 0
  %v214 = vsel %vm164, %v100, 0
  %v217 = vsel %vm164, %v101, 0
  %v220 = vsel %vm164, %v102, 0
  %v223 = vsel %vm164, %v103, 0
  %225 = vmatprep.subr.bf16.mxu0 0
  %226 = vmatpush1.bf16.xpose.msra.mxu0 %v178
  %227 = vmatprep.subr.bf16.mxu0 0
  %228 = vmatpush1.bf16.xpose.msra.mxu0 %v181
  %229 = vmatprep.subr.bf16.mxu0 0
  %230 = vmatpush1.bf16.xpose.msra.mxu0 %v184
  %231 = vmatprep.subr.bf16.mxu0 0
  %232 = vmatpush1.bf16.xpose.msra.mxu0 %v187
  %233 = vmatprep.subr.bf16.mxu0 0
  %234 = vmatpush1.bf16.xpose.msra.mxu0 %v190
  %235 = vmatprep.subr.bf16.mxu0 0
  %236 = vmatpush1.bf16.xpose.msra.mxu0 %v193
  %237 = vmatprep.subr.bf16.mxu0 0
  %238 = vmatpush1.bf16.xpose.msra.mxu0 %v196
  %239 = vmatprep.subr.bf16.mxu0 0
  %240 = vmatpush1.bf16.xpose.msra.mxu0 %v199
  %241 = vmatprep.subr.bf16.mxu0 0
  %242 = vmatpush1.bf16.xpose.msra.mxu0 %v202
  %243 = vmatprep.subr.bf16.mxu0 0
  %244 = vmatpush1.bf16.xpose.msra.mxu0 %v205
  %245 = vmatprep.subr.bf16.mxu0 0
  %246 = vmatpush1.bf16.xpose.msra.mxu0 %v208
  %247 = vmatprep.subr.bf16.mxu0 0
  %248 = vmatpush1.bf16.xpose.msra.mxu0 %v211
  %249 = vmatprep.subr.bf16.mxu0 0
  %250 = vmatpush1.bf16.xpose.msra.mxu0 %v214
  %251 = vmatprep.subr.bf16.mxu0 0
  %252 = vmatpush1.bf16.xpose.msra.mxu0 %v217
  %253 = vmatprep.subr.bf16.mxu0 0
  %254 = vmatpush1.bf16.xpose.msra.mxu0 %v220
  %255 = vmatprep.subr.bf16.mxu0 0
  %256 = vmatpush1.bf16.xpose.msra.mxu0 %v223
  %257 = vmatprep.mubr.bf16.mxu0 0
  %258 = vmatmul.mubr.bf16.gmra.mrb[0].mxu0 %v166
  %v259 = vpop.f32.mrb[0].mxu0
  %v260 = vadd.f32 %v107, %v259
  %v261 = vpop.f32.mrb[0].mxu0
  %v262 = vadd.f32 %v107, %v261
  %v263 = vpop.f32.mrb[0].mxu0
  %v264 = vadd.f32 %v112, %v263
  %v265 = vpop.f32.mrb[0].mxu0
  %v266 = vadd.f32 %v112, %v265
  %267 = vmatprep.mubr.bf16.mxu0 0
  %268 = vmatmul.mubr.bf16.gmra.mrb[0].mxu0 %v169
  %v269 = vpop.f32.mrb[0].mxu0
  %v270 = vadd.f32 %v117, %v269
  %v271 = vpop.f32.mrb[0].mxu0
  %v272 = vadd.f32 %v117, %v271
  %v273 = vpop.f32.mrb[0].mxu0
  %v274 = vadd.f32 %v122, %v273
  %v275 = vpop.f32.mrb[0].mxu0
  %v276 = vadd.f32 %v122, %v275
  %277 = vmatprep.mubr.bf16.mxu0 0
  %278 = vmatmul.mubr.bf16.gmra.mrb[0].mxu0 %v172
  %v279 = vpop.f32.mrb[0].mxu0
  %v280 = vadd.f32 %v127, %v279
  %v281 = vpop.f32.mrb[0].mxu0
  %v282 = vadd.f32 %v127, %v281
  %v283 = vpop.f32.mrb[0].mxu0
  %v284 = vadd.f32 %v132, %v283
  %v285 = vpop.f32.mrb[0].mxu0
  %v286 = vadd.f32 %v132, %v285
  %287 = vmatprep.mubr.bf16.mxu0 0
  %288 = vmatmul.mubr.bf16.gmra.mrb[0].mxu0 %v175
  %v289 = vpop.f32.mrb[0].mxu0
  %v290 = vadd.f32 %v137, %v289
  %v291 = vpop.f32.mrb[0].mxu0
  %v292 = vadd.f32 %v137, %v291
  %v293 = vpop.f32.mrb[0].mxu0
  %v294 = vadd.f32 %v142, %v293
  %v295 = vpop.f32.mrb[0].mxu0
  %v296 = vadd.f32 %v142, %v295
  %297 = vdwg.mxu0
  %v298 = vmax.f32 %v260, 0.0
  %v299 = vmax.f32 %v262, 0.0
  %v300 = vmax.f32 %v264, 0.0
  %v301 = vmax.f32 %v266, 0.0
  %v302 = vmax.f32 %v270, 0.0
  %v303 = vmax.f32 %v272, 0.0
  %v304 = vmax.f32 %v274, 0.0
  %v305 = vmax.f32 %v276, 0.0
  %v306 = vmax.f32 %v280, 0.0
  %v307 = vmax.f32 %v282, 0.0
  %v308 = vmax.f32 %v284, 0.0
  %v309 = vmax.f32 %v286, 0.0
  %v310 = vmax.f32 %v290, 0.0
  %v311 = vmax.f32 %v292, 0.0
  %v312 = vmax.f32 %v294, 0.0
  %v313 = vmax.f32 %v296, 0.0
  %315 = vset.pattern.permute.xlu0 0
  %316 = vperm.xlu0 %315, %v44
  %v317 = vpop.permute.xlu0 %316
  %320 = vset.pattern.permute.xlu0 0
  %321 = vperm.xlu0 %320, %v45
  %v322 = vpop.permute.xlu0 %321
  %325 = vset.pattern.permute.xlu0 0
  %326 = vperm.xlu0 %325, %v46
  %v327 = vpop.permute.xlu0 %326
  %330 = vset.pattern.permute.xlu0 0
  %331 = vperm.xlu0 %330, %v47
  %v332 = vpop.permute.xlu0 %331
  %335 = vset.pattern.permute.xlu0 0
  %336 = vperm.xlu0 %335, %v48
  %v337 = vpop.permute.xlu0 %336
  %340 = vset.pattern.permute.xlu0 0
  %341 = vperm.xlu0 %340, %v49
  %v342 = vpop.permute.xlu0 %341
  %345 = vset.pattern.permute.xlu0 0
  %346 = vperm.xlu0 %345, %v50
  %v347 = vpop.permute.xlu0 %346
  %350 = vset.pattern.permute.xlu0 0
  %351 = vperm.xlu0 %350, %v51
  %v352 = vpop.permute.xlu0 %351
  %v354 = vmul.f32 %v298, %v317
  %v355 = vmul.f32 %v299, %v317
  %v356 = vmul.f32 %v300, %v322
  %v357 = vmul.f32 %v301, %v322
  %v358 = vmul.f32 %v302, %v327
  %v359 = vmul.f32 %v303, %v327
  %v360 = vmul.f32 %v304, %v332
  %v361 = vmul.f32 %v305, %v332
  %v362 = vmul.f32 %v306, %v337
  %v363 = vmul.f32 %v307, %v337
  %v364 = vmul.f32 %v308, %v342
  %v365 = vmul.f32 %v309, %v342
  %v366 = vmul.f32 %v310, %v347
  %v367 = vmul.f32 %v311, %v347
  %v368 = vmul.f32 %v312, %v352
  %v369 = vmul.f32 %v313, %v352
  %v370 = vadd.f32 %v354, %v356
  %v371 = vadd.f32 %v370, %v358
  %v372 = vadd.f32 %v371, %v360
  %v373 = vadd.f32 %v372, %v362
  %v374 = vadd.f32 %v373, %v364
  %v375 = vadd.f32 %v374, %v366
  %v376 = vadd.f32 %v375, %v368
  %v377 = vrot.slane %v376, 4
  %v378 = vadd.f32 %v376, %v377
  %v379 = vrot.slane %v378, 2
  %v380 = vadd.f32 %v378, %v379
  %v381 = vrot.slane %v380, 1
  %v382 = vadd.f32 %v380, %v381
  %v383 = vadd.f32 %v355, %v357
  %v384 = vadd.f32 %v383, %v359
  %v385 = vadd.f32 %v384, %v361
  %v386 = vadd.f32 %v385, %v363
  %v387 = vadd.f32 %v386, %v365
  %v388 = vadd.f32 %v387, %v367
  %v389 = vadd.f32 %v388, %v369
  %v390 = vrot.slane %v389, 4
  %v391 = vadd.f32 %v389, %v390
  %v392 = vrot.slane %v391, 2
  %v393 = vadd.f32 %v391, %v392
  %v394 = vrot.slane %v393, 1
  %v395 = vadd.f32 %v393, %v394
  %v396 = vstv %s52
  %v397 = vadd.f32 %v382, %v396
  %v398 = vadd.f32 %v395, %v396
  %v401 = vcombine.low %v397, %v398
  %v403 = vunpack.c.l.s4 1966171168
  %v404 = vunpack.c.0.s8 %v403
  %v405 = vlaneseq
  %v406 = vshrl.u32 %v405, 7
  %v407 = vsub.s32 %v404, %v406
  %v408 = vrot.slane %v401, %v407
  %v410 = vunpack.c.l.s4 1966171168
  %v411 = vunpack.c.0.s8 %v410
  %v412 = vlaneseq
  %v413 = vshrl.u32 %v412, 7
  %v414 = vsub.s32 %v411, %v413
  %v415 = vrot.slane %v408, %v414
  %v417 = vlaneseq
  %vm418 = vcmp.ge.s32.totalorder %v417, 0
  %vm419 = vcmp.lt.s32.totalorder %v417, 256
  %vm420 = vmand %vm418, %vm419
  %421 = vst.msk [vmem:[%s6] sm:$0x3] %vm420, %v415
  %v422 = vld [vmem:[%s1] sm:$0x3]
  %v423 = vmax.f32 %v397, 0.0
  %v424 = vmax.f32 %v398, 0.0
  %v426 = vlaneseq
  %v427 = vshrl.u32 %v426, 7
  %v428 = vsub.s32 0, %v427
  %v429 = vrot.slane %v422, %v428
  %v430 = vlaneseq
  %v431 = vshrl.u32 %v430, 7
  %v432 = vsub.s32 1, %v431
  %v433 = vrot.slane %v422, %v432
  %v436 = vmul.f32 %v397, %v429
  %v437 = vmul.f32 %v398, %v433
  %v438 = vsub.f32 %v423, %v436
  %v439 = vsub.f32 %v424, %v437
  %v440 = vand.u32 2147483647, %v397
  %v441 = vand.u32 2147483647, %v398
  %v442 = vsub.f32 0.0, %v440
  %v443 = vsub.f32 0.0, %v441
  %v444 = vmul.f32 %v442, 1.442695
  %v445 = vpow.pop %v444
  %v446 = vmul.f32 %v443, 1.442695
  %v447 = vpow.pop %v446
  %v448 = vadd.f32 %v445, 1.0
  %v449 = vlog2.pop %v448
  %v450 = vmul.f32 %v449, 0.6931472
  %v451 = vmul.f32 -0.5, %v445
  %v452 = vadd.f32 %v451, 1.0
  %v453 = vmul.f32 %v452, %v445
  %v454 = vand.u32 2147483647, %v445
  %vm455 = vcmp.lt.f32.partialorder %v454, 0.0004427343
  %v456 = vsel %vm455, %v453, %v450
  %v457 = vadd.f32 %v447, 1.0
  %v458 = vlog2.pop %v457
  %v459 = vmul.f32 %v458, 0.6931472
  %v460 = vmul.f32 -0.5, %v447
  %v461 = vadd.f32 %v460, 1.0
  %v462 = vmul.f32 %v461, %v447
  %v463 = vand.u32 2147483647, %v447
  %vm464 = vcmp.lt.f32.partialorder %v463, 0.0004427343
  %v465 = vsel %vm464, %v462, %v459
  %v466 = vadd.f32 %v438, %v456
  %v467 = vadd.f32 %v439, %v465
  %s468 = sadd.s32 %s27, 0
  %v469 = vstv %s468
  %v470 = vadd.s32 %v469, %v54
  %v471 = vadd.s32 %v469, %v55
  %vm472 = vcmp.lt.s32.totalorder %v470, 8
  %vm473 = vcmp.lt.s32.totalorder %v471, 8
  %v474 = vsel %vm472, %v466, 0.0
  %v475 = vsel %vm473, %v467, 0.0
  %vm476 = vcmask 1040384
  %v477 = vsel %vm476, %v474, 0.0
  %v478 = vsel %vm476, %v475, 0.0
  %v479 = vadd.f32 %v477, %v478
  %480 = vadd.xlane.f32.xlu0 %v479
  %v481 = vpop.xlane.xlu0 %480
  %v482 = vrot.slane %v481, 4
  %v483 = vadd.f32 %v481, %v482
  %v484 = vrot.slane %v483, 2
  %v485 = vadd.f32 %v483, %v484
  %v486 = vrot.slane %v485, 1
  %v487 = vadd.f32 %v485, %v486
  %s488 = vtos %v487
  %s489 = sadd.f32 %s488, 0.0
  %vm490 = vcmp.eq.s32.totalorder %v54, 0
  %v491 = vstv %s489
  %v492 = vsel %vm490, %v491, 0.0
  %493 = vst [vmem:[%s7] sm:$0x1] %v492
  // Predicated region
  $region26: #{classifier_forward.1} parent=0 // pred_check
    _
  $region27: #{classifier_forward.1} parent=0 // pred_check_branch
    %495 = sbr.rel (0) target = $region29
  $region28: #{classifier_forward.1} parent=0 // pred_region
    _
  $region29: #{classifier_forward.1} parent=0 // pred_fallthru
    _
  // Predicated region
  $region30: #{classifier_forward.1} parent=0 // pred_check
    _
  $region31: #{classifier_forward.1} parent=0 // pred_check_branch
    %497 = sbr.rel (0) target = $region33
  $region32: #{classifier_forward.1} parent=0 // pred_region
    _
  $region33: #{classifier_forward.1} parent=0 // pred_fallthru
    _
  // Predicated region
  $region34: #{classifier_forward.1} parent=0 // pred_check
    _
  $region35: #{classifier_forward.1} parent=0 // pred_check_branch
    %499 = sbr.rel (0) target = $region37
  $region36: #{classifier_forward.1} parent=0 // pred_region
    _
  $region37: #{classifier_forward.1} parent=0 // pred_fallthru
    _
  // Predicated region
  $region38: #{classifier_forward.1} parent=0 // pred_check
    _
  $region39: #{classifier_forward.1} parent=0 // pred_check_branch
    %501 = sbr.rel (0) target = $region41
  $region40: #{classifier_forward.1} parent=0 // pred_region
    _
  $region41: #{classifier_forward.1} parent=0 // pred_fallthru
    _

</llo_original>
